<compile_context>
chip_gen: v5e
topology: v5e:2x2
jax: 0.10.0
libtpu: 0.0.40
codegen_flags: <defaults>
</compile_context>

<pallas_src>
import functools

import jax
import jax.numpy as jnp
from jax.experimental import pallas as pl
from jax.experimental.pallas import tpu as pltpu


def _round_up(a, m):
    return ((a + m - 1) // m) * m


def _cdiv(a, b):
    return (a + b - 1) // b


def _stack_hidden(x, w0, b0, wh, bh, *, stack_num, compute_dtype):
    """start Linear + stack_num x (shared Linear + tanh); f32 activations, bf16 dots."""
    h = jnp.dot(x.astype(compute_dtype), w0, preferred_element_type=jnp.float32) + b0

    def body(_, hh):
        return jnp.tanh(
            jnp.dot(hh.astype(compute_dtype), wh, preferred_element_type=jnp.float32) + bh)

    if stack_num <= 4:
        # short fixed trip count: static unroll (LLO scheduler visibility)
        for _ in range(stack_num):
            h = body(0, h)
    else:
        # larger depth: real loop bounds vreg live ranges and avoids spills
        h = jax.lax.fori_loop(0, stack_num, body, h, unroll=2)
    return h


def _kernel_out1(x_ref, w0_ref, b0_ref, wh_ref, bh_ref, we_ref, be_ref, o_ref,
                 *, stack_num, compute_dtype):
    """output_dim == 1 path: end projection produces a lane-dense (1, block_batch) row."""
    half = x_ref.shape[0] // 2

    # Load weights/biases ONCE (hoisted out of the unrolled stack; JAX does not CSE).
    w0 = w0_ref[...]                              # compute dtype (cast once in wrapper)
    b0 = b0_ref[...].astype(jnp.float32)
    wh = wh_ref[...]
    bh = bh_ref[...].astype(jnp.float32)
    we = we_ref[...]                              # (1, hidden) row, compute dtype
    be = be_ref[...].astype(jnp.float32)          # (1, 1)

    def chain(x):
        h = _stack_hidden(x, w0, b0, wh, bh,
                          stack_num=stack_num, compute_dtype=compute_dtype)
        # end: (1, H) @ (H, half) -> lane-dense (1, half) row; bias add stays f32.
        return jnp.dot(we, h.T.astype(compute_dtype),
                       preferred_element_type=jnp.float32) + be

    # Two independent dependency chains -> MXU of one overlaps EUP tanh of the other.
    y0 = chain(x_ref[:half, :])
    y1 = chain(x_ref[half:, :])
    o_ref[:, :half] = y0.astype(o_ref.dtype)
    o_ref[:, half:] = y1.astype(o_ref.dtype)


def _kernel_general(x_ref, w0_ref, b0_ref, wh_ref, bh_ref, we_ref, be_ref, o_ref,
                    *, stack_num, compute_dtype):
    """General output_dim path: lane-padded end matmul (we pre-padded in prepare_params)."""
    half = x_ref.shape[0] // 2
    w0 = w0_ref[...]
    b0 = b0_ref[...].astype(jnp.float32)
    wh = wh_ref[...]
    bh = bh_ref[...].astype(jnp.float32)
    we = we_ref[...]
    be = be_ref[...].astype(jnp.float32)

    def chain(x):
        h = _stack_hidden(x, w0, b0, wh, bh,
                          stack_num=stack_num, compute_dtype=compute_dtype)
        return jnp.dot(h.astype(compute_dtype), we,
                       preferred_element_type=jnp.float32) + be

    y0 = chain(x_ref[:half, :])
    y1 = chain(x_ref[half:, :])
    o_ref[:half, :] = y0.astype(o_ref.dtype)
    o_ref[half:, :] = y1.astype(o_ref.dtype)


def prepare_params(w0, b0, wh, bh, we, be, *, compute_dtype=jnp.bfloat16):
    """One-time parameter prep (casts / padding) hoisted out of the per-call hot path."""
    hidden_dim = wh.shape[0]
    output_dim = we.shape[1]
    params = {
        "w0": w0.astype(compute_dtype),
        "b0": b0.reshape(1, -1).astype(jnp.float32),
        "wh": wh.astype(compute_dtype),
        "bh": bh.reshape(1, -1).astype(jnp.float32),
        "output_dim": output_dim,
        "compute_dtype": compute_dtype,
    }
    if output_dim == 1:
        # end weight as a (1, hidden) row -> kernel computes we_row @ h^T (lane-dense out)
        params["we"] = we.reshape(1, hidden_dim).astype(compute_dtype)
        params["be"] = be.reshape(1, 1).astype(jnp.float32)
    else:
        out_pad = _round_up(output_dim, 128)
        we_p = jnp.zeros((hidden_dim, out_pad), compute_dtype)
        we_p = we_p.at[:, :output_dim].set(we.astype(compute_dtype))
        be_p = jnp.zeros((1, out_pad), jnp.float32)
        be_p = be_p.at[:, :output_dim].set(be.reshape(1, -1).astype(jnp.float32))
        params["we"] = we_p
        params["be"] = be_p
    return params


def linear_x_stack(x, params, *, stack_num, block_batch=512):
    batch, input_dim = x.shape
    hidden_dim = params["wh"].shape[0]
    output_dim = params["output_dim"]
    compute_dtype = params["compute_dtype"]

    # ---- batch tiling: multiple of 128, >= 2 tiles when the batch is big enough (v7x 2-TC) ----
    block_batch = max(128, min(_round_up(block_batch, 128), _round_up(batch, 128)))
    num_tiles = _cdiv(batch, block_batch)
    if num_tiles == 1 and batch > 256:
        block_batch = _round_up(_cdiv(batch, 2), 128)
        num_tiles = _cdiv(batch, block_batch)
    padded_batch = num_tiles * block_batch
    assert block_batch % 2 == 0 and (block_batch // 2) % 8 == 0, "half-split needs sublane-aligned halves"

    if padded_batch != batch:
        x_p = jnp.zeros((padded_batch, input_dim), x.dtype).at[:batch].set(x)
    else:
        x_p = x

    grid = (num_tiles,)

    # advisory cost hint for XLA scheduling around the custom call
    flops = 2 * padded_batch * hidden_dim * (input_dim + stack_num * hidden_dim + output_dim)
    transcendentals = padded_batch * hidden_dim * stack_num
    param_bytes = sum(int(params[k].size) * params[k].dtype.itemsize
                      for k in ("w0", "b0", "wh", "bh", "we", "be"))
    in_bytes = int(x_p.size) * x_p.dtype.itemsize + param_bytes

    weight_specs = [
        pl.BlockSpec((input_dim, hidden_dim), lambda i: (0, 0)),   # w0 (resident)
        pl.BlockSpec((1, hidden_dim), lambda i: (0, 0)),           # b0
        pl.BlockSpec((hidden_dim, hidden_dim), lambda i: (0, 0)),  # wh (shared, resident)
        pl.BlockSpec((1, hidden_dim), lambda i: (0, 0)),           # bh
    ]

    if output_dim == 1:
        kernel = functools.partial(_kernel_out1,
                                   stack_num=stack_num, compute_dtype=compute_dtype)
        out_shape = jax.ShapeDtypeStruct((1, padded_batch), jnp.float32)
        out_spec = pl.BlockSpec((1, block_batch), lambda i: (0, i))
        end_specs = [
            pl.BlockSpec((1, hidden_dim), lambda i: (0, 0)),       # we row
            pl.BlockSpec((1, 1), lambda i: (0, 0)),                # be scalar
        ]
        out_bytes = padded_batch * 4
    else:
        out_pad = params["we"].shape[1]
        kernel = functools.partial(_kernel_general,
                                   stack_num=stack_num, compute_dtype=compute_dtype)
        out_shape = jax.ShapeDtypeStruct((padded_batch, out_pad), jnp.float32)
        out_spec = pl.BlockSpec((block_batch, out_pad), lambda i: (i, 0))
        end_specs = [
            pl.BlockSpec((hidden_dim, out_pad), lambda i: (0, 0)),
            pl.BlockSpec((1, out_pad), lambda i: (0, 0)),
        ]
        out_bytes = padded_batch * out_pad * 4

    cost = pl.CostEstimate(flops=int(flops),
                           transcendentals=int(transcendentals),
                           bytes_accessed=int(in_bytes + out_bytes))

    out = pl.pallas_call(
        kernel,
        out_shape=out_shape,
        grid_spec=pltpu.PrefetchScalarGridSpec(
            num_scalar_prefetch=0,
            grid=grid,
            in_specs=[pl.BlockSpec((block_batch, input_dim), lambda i: (i, 0))]
                     + weight_specs + end_specs,
            out_specs=out_spec,
        ),
        compiler_params=pltpu.CompilerParams(
            dimension_semantics=("parallel",),
        ),
        cost_estimate=cost,
    )(x_p, params["w0"], params["b0"], params["wh"], params["bh"],
      params["we"], params["be"])

    if output_dim == 1:
        # lane-dense (1, padded_batch) row -> (batch, 1) column
        return out.reshape(-1)[:batch].reshape(batch, 1)
    return out[:batch, :output_dim]


def _torch_linear_init(key, fan_in, fan_out):
    """Deterministic init mimicking nn.Linear: U(-1/sqrt(fan_in), 1/sqrt(fan_in))."""
    k_w, k_b = jax.random.split(key)
    bound = 1.0 / jnp.sqrt(jnp.float32(fan_in))
    w = jax.random.uniform(k_w, (fan_in, fan_out), jnp.float32, -bound, bound)
    b = jax.random.uniform(k_b, (1, fan_out), jnp.float32, -bound, bound)
    return w, b


def reference_f32(x, w0, b0, wh, bh, we, be, *, stack_num):
    h = x @ w0 + b0
    for _ in range(stack_num):
        h = jnp.tanh(h @ wh + bh)
    return h @ we + be


def reference_mixed(x, w0, b0, wh, bh, we, be, *, stack_num, compute_dtype):
    """Pure-JAX reference mirroring the kernel's bf16-dot / f32-accumulate path."""
    cd = compute_dtype
    h = jnp.dot(x.astype(cd), w0.astype(cd), preferred_element_type=jnp.float32) + b0
    for _ in range(stack_num):
        h = jnp.tanh(jnp.dot(h.astype(cd), wh.astype(cd),
                             preferred_element_type=jnp.float32) + bh)
    return jnp.dot(h.astype(cd), we.astype(cd), preferred_element_type=jnp.float32) + be


if __name__ == "__main__":
    # small, forward-consistent shapes
    batch = 8
    input_dim = 8        # stand-in for len(df columns) - 1
    hidden_dim = 128
    output_dim = 1
    stack_num = 3

    key = jax.random.PRNGKey(0)
    k_x, k_s, k_h, k_e, k_x2 = jax.random.split(key, 5)

    x = jax.random.normal(k_x, (batch, input_dim), jnp.float32)
    w0, b0 = _torch_linear_init(k_s, input_dim, hidden_dim)    # self.start
    wh, bh = _torch_linear_init(k_h, hidden_dim, hidden_dim)   # shared hidden block
    we, be = _torch_linear_init(k_e, hidden_dim, output_dim)   # self.end

    # one-time parameter prep (casts / padding hoisted out of the per-call path)
    params = prepare_params(w0, b0, wh, bh, we, be, compute_dtype=jnp.bfloat16)

    # --- small-batch check (single 128-row tile, static-unrolled stack) ---
    y = jax.block_until_ready(linear_x_stack(x, params, stack_num=stack_num))
    assert y.shape == (batch, output_dim)
    y_mix = reference_mixed(x, w0, b0, wh, bh, we, be,
                            stack_num=stack_num, compute_dtype=jnp.bfloat16)
    y_f32 = reference_f32(x, w0, b0, wh, bh, we, be, stack_num=stack_num)
    assert jnp.allclose(y, y_mix, atol=1e-2, rtol=1e-2), "mismatch vs mixed-precision reference"
    assert jnp.allclose(y, y_f32, atol=5e-2, rtol=5e-2), "mismatch vs f32 reference"

    # --- multi-tile check: 2-tile grid (v7x 2-TC shardable) + fori_loop stack path ---
    batch2 = 300
    stack_num2 = 6
    x2 = jax.random.normal(k_x2, (batch2, input_dim), jnp.float32)
    y2 = jax.block_until_ready(linear_x_stack(x2, params, stack_num=stack_num2))
    assert y2.shape == (batch2, output_dim)
    y2_mix = reference_mixed(x2, w0, b0, wh, bh, we, be,
                             stack_num=stack_num2, compute_dtype=jnp.bfloat16)
    assert jnp.allclose(y2, y2_mix, atol=1e-2, rtol=1e-2), "multi-tile mismatch"

    print("KERNEL_OK")
</pallas_src>

<mosaic_0001>
module attributes {stable_mosaic.version = 11 : i64} {
  func.func @_kernel_out1(%arg0: i32, %arg1: memref<128x8xf32, #tpu.memory_space<vmem>>, %arg2: memref<8x128xbf16, #tpu.memory_space<vmem>>, %arg3: memref<1x128xf32, #tpu.memory_space<vmem>>, %arg4: memref<128x128xbf16, #tpu.memory_space<vmem>>, %arg5: memref<1x128xf32, #tpu.memory_space<vmem>>, %arg6: memref<1x128xbf16, #tpu.memory_space<vmem>>, %arg7: memref<1x1xf32, #tpu.memory_space<vmem>>, %arg8: memref<1x128xf32, #tpu.memory_space<vmem>>) attributes {dimension_semantics = [#tpu.dimension_semantics<parallel>], iteration_bounds = array<i64: 1>, scalar_prefetch = 0 : i64, scratch_operands = 0 : i64, tpu.core_type = #tpu.core_type<tc>, window_params = [{transform_indices = @transform_0, window_bounds = array<i64: 128, 8>}, {pipeline_mode = #tpu.pipeline_mode<synchronous>, transform_indices = @transform_1, window_bounds = array<i64: 8, 128>}, {pipeline_mode = #tpu.pipeline_mode<synchronous>, transform_indices = @transform_2, window_bounds = array<i64: 1, 128>}, {pipeline_mode = #tpu.pipeline_mode<synchronous>, transform_indices = @transform_3, window_bounds = array<i64: 128, 128>}, {pipeline_mode = #tpu.pipeline_mode<synchronous>, transform_indices = @transform_4, window_bounds = array<i64: 1, 128>}, {pipeline_mode = #tpu.pipeline_mode<synchronous>, transform_indices = @transform_5, window_bounds = array<i64: 1, 128>}, {pipeline_mode = #tpu.pipeline_mode<synchronous>, transform_indices = @transform_6, window_bounds = array<i64: 1, 1>}, {transform_indices = @transform_7, window_bounds = array<i64: 1, 128>}]} {
    %c0 = arith.constant 0 : index
    %c0_0 = arith.constant 0 : index
    %0 = vector.load %arg2[%c0, %c0_0] : memref<8x128xbf16, #tpu.memory_space<vmem>>, vector<8x128xbf16>
    %c0_1 = arith.constant 0 : index
    %c0_2 = arith.constant 0 : index
    %1 = vector.load %arg3[%c0_1, %c0_2] : memref<1x128xf32, #tpu.memory_space<vmem>>, vector<1x128xf32>
    %c0_3 = arith.constant 0 : index
    %c0_4 = arith.constant 0 : index
    %2 = vector.load %arg4[%c0_3, %c0_4] : memref<128x128xbf16, #tpu.memory_space<vmem>>, vector<128x128xbf16>
    %c0_5 = arith.constant 0 : index
    %c0_6 = arith.constant 0 : index
    %3 = vector.load %arg5[%c0_5, %c0_6] : memref<1x128xf32, #tpu.memory_space<vmem>>, vector<1x128xf32>
    %c0_7 = arith.constant 0 : index
    %c0_8 = arith.constant 0 : index
    %4 = vector.load %arg6[%c0_7, %c0_8] : memref<1x128xbf16, #tpu.memory_space<vmem>>, vector<1x128xbf16>
    %c0_9 = arith.constant 0 : index
    %c0_10 = arith.constant 0 : index
    %5 = vector.load %arg7[%c0_9, %c0_10] : memref<1x1xf32, #tpu.memory_space<vmem>>, vector<1x1xf32>
    %c0_11 = arith.constant 0 : index
    %c0_12 = arith.constant 0 : index
    %6 = vector.load %arg1[%c0_11, %c0_12] : memref<128x8xf32, #tpu.memory_space<vmem>>, vector<64x8xf32>
    %7 = arith.truncf %6 : vector<64x8xf32> to vector<64x8xbf16>
    %cst = arith.constant dense<0.000000e+00> : vector<64x128xf32>
    %8 = tpu.matmul %7, %0, %cst {dimension_numbers = #tpu.dot_dimension_numbers<[1], [0], [0], [1], [0, 0, 1, 1], [], []>} : vector<64x8xbf16>, vector<8x128xbf16>, vector<64x128xf32> -> vector<64x128xf32>
    %9 = vector.broadcast %1 : vector<1x128xf32> to vector<64x128xf32>
    %10 = arith.addf %8, %9 : vector<64x128xf32>
    %11 = arith.truncf %10 : vector<64x128xf32> to vector<64x128xbf16>
    %cst_13 = arith.constant dense<0.000000e+00> : vector<64x128xf32>
    %12 = tpu.matmul %11, %2, %cst_13 {dimension_numbers = #tpu.dot_dimension_numbers<[1], [0], [0], [1], [0, 0, 1, 1], [], []>} : vector<64x128xbf16>, vector<128x128xbf16>, vector<64x128xf32> -> vector<64x128xf32>
    %13 = vector.broadcast %3 : vector<1x128xf32> to vector<64x128xf32>
    %14 = arith.addf %12, %13 : vector<64x128xf32>
    %15 = math.tanh %14 : vector<64x128xf32>
    %16 = arith.truncf %15 : vector<64x128xf32> to vector<64x128xbf16>
    %cst_14 = arith.constant dense<0.000000e+00> : vector<64x128xf32>
    %17 = tpu.matmul %16, %2, %cst_14 {dimension_numbers = #tpu.dot_dimension_numbers<[1], [0], [0], [1], [0, 0, 1, 1], [], []>} : vector<64x128xbf16>, vector<128x128xbf16>, vector<64x128xf32> -> vector<64x128xf32>
    %18 = vector.broadcast %3 : vector<1x128xf32> to vector<64x128xf32>
    %19 = arith.addf %17, %18 : vector<64x128xf32>
    %20 = math.tanh %19 : vector<64x128xf32>
    %21 = arith.truncf %20 : vector<64x128xf32> to vector<64x128xbf16>
    %cst_15 = arith.constant dense<0.000000e+00> : vector<64x128xf32>
    %22 = tpu.matmul %21, %2, %cst_15 {dimension_numbers = #tpu.dot_dimension_numbers<[1], [0], [0], [1], [0, 0, 1, 1], [], []>} : vector<64x128xbf16>, vector<128x128xbf16>, vector<64x128xf32> -> vector<64x128xf32>
    %23 = vector.broadcast %3 : vector<1x128xf32> to vector<64x128xf32>
    %24 = arith.addf %22, %23 : vector<64x128xf32>
    %25 = math.tanh %24 : vector<64x128xf32>
    %26 = tpu.transpose %25, [1, 0] : vector<64x128xf32> -> vector<128x64xf32>
    %27 = arith.truncf %26 : vector<128x64xf32> to vector<128x64xbf16>
    %cst_16 = arith.constant dense<0.000000e+00> : vector<1x64xf32>
    %28 = tpu.matmul %4, %27, %cst_16 {dimension_numbers = #tpu.dot_dimension_numbers<[1], [0], [0], [1], [0, 0, 1, 1], [], []>} : vector<1x128xbf16>, vector<128x64xbf16>, vector<1x64xf32> -> vector<1x64xf32>
    %29 = vector.broadcast %5 : vector<1x1xf32> to vector<1x64xf32>
    %30 = arith.addf %28, %29 : vector<1x64xf32>
    %c64 = arith.constant 64 : index
    %c0_17 = arith.constant 0 : index
    %31 = vector.load %arg1[%c64, %c0_17] : memref<128x8xf32, #tpu.memory_space<vmem>>, vector<64x8xf32>
    %32 = arith.truncf %31 : vector<64x8xf32> to vector<64x8xbf16>
    %cst_18 = arith.constant dense<0.000000e+00> : vector<64x128xf32>
    %33 = tpu.matmul %32, %0, %cst_18 {dimension_numbers = #tpu.dot_dimension_numbers<[1], [0], [0], [1], [0, 0, 1, 1], [], []>} : vector<64x8xbf16>, vector<8x128xbf16>, vector<64x128xf32> -> vector<64x128xf32>
    %34 = vector.broadcast %1 : vector<1x128xf32> to vector<64x128xf32>
    %35 = arith.addf %33, %34 : vector<64x128xf32>
    %36 = arith.truncf %35 : vector<64x128xf32> to vector<64x128xbf16>
    %cst_19 = arith.constant dense<0.000000e+00> : vector<64x128xf32>
    %37 = tpu.matmul %36, %2, %cst_19 {dimension_numbers = #tpu.dot_dimension_numbers<[1], [0], [0], [1], [0, 0, 1, 1], [], []>} : vector<64x128xbf16>, vector<128x128xbf16>, vector<64x128xf32> -> vector<64x128xf32>
    %38 = vector.broadcast %3 : vector<1x128xf32> to vector<64x128xf32>
    %39 = arith.addf %37, %38 : vector<64x128xf32>
    %40 = math.tanh %39 : vector<64x128xf32>
    %41 = arith.truncf %40 : vector<64x128xf32> to vector<64x128xbf16>
    %cst_20 = arith.constant dense<0.000000e+00> : vector<64x128xf32>
    %42 = tpu.matmul %41, %2, %cst_20 {dimension_numbers = #tpu.dot_dimension_numbers<[1], [0], [0], [1], [0, 0, 1, 1], [], []>} : vector<64x128xbf16>, vector<128x128xbf16>, vector<64x128xf32> -> vector<64x128xf32>
    %43 = vector.broadcast %3 : vector<1x128xf32> to vector<64x128xf32>
    %44 = arith.addf %42, %43 : vector<64x128xf32>
    %45 = math.tanh %44 : vector<64x128xf32>
    %46 = arith.truncf %45 : vector<64x128xf32> to vector<64x128xbf16>
    %cst_21 = arith.constant dense<0.000000e+00> : vector<64x128xf32>
    %47 = tpu.matmul %46, %2, %cst_21 {dimension_numbers = #tpu.dot_dimension_numbers<[1], [0], [0], [1], [0, 0, 1, 1], [], []>} : vector<64x128xbf16>, vector<128x128xbf16>, vector<64x128xf32> -> vector<64x128xf32>
    %48 = vector.broadcast %3 : vector<1x128xf32> to vector<64x128xf32>
    %49 = arith.addf %47, %48 : vector<64x128xf32>
    %50 = math.tanh %49 : vector<64x128xf32>
    %51 = tpu.transpose %50, [1, 0] : vector<64x128xf32> -> vector<128x64xf32>
    %52 = arith.truncf %51 : vector<128x64xf32> to vector<128x64xbf16>
    %cst_22 = arith.constant dense<0.000000e+00> : vector<1x64xf32>
    %53 = tpu.matmul %4, %52, %cst_22 {dimension_numbers = #tpu.dot_dimension_numbers<[1], [0], [0], [1], [0, 0, 1, 1], [], []>} : vector<1x128xbf16>, vector<128x64xbf16>, vector<1x64xf32> -> vector<1x64xf32>
    %54 = vector.broadcast %5 : vector<1x1xf32> to vector<1x64xf32>
    %55 = arith.addf %53, %54 : vector<1x64xf32>
    %c0_23 = arith.constant 0 : index
    %c0_24 = arith.constant 0 : index
    %56 = vector.load %arg8[%c0_23, %c0_24] : memref<1x128xf32, #tpu.memory_space<vmem>>, vector<1x64xf32>
    tpu.vector_store %arg8[%c0_23, %c0_24], %30 {strides = array<i32>} : memref<1x128xf32, #tpu.memory_space<vmem>>, vector<1x64xf32>,
    %c0_25 = arith.constant 0 : index
    %c64_26 = arith.constant 64 : index
    %57 = vector.load %arg8[%c0_25, %c64_26] : memref<1x128xf32, #tpu.memory_space<vmem>>, vector<1x64xf32>
    tpu.vector_store %arg8[%c0_25, %c64_26], %55 {strides = array<i32>} : memref<1x128xf32, #tpu.memory_space<vmem>>, vector<1x64xf32>,
    return
  }
  func.func @transform_0(%arg0: i32) -> (i32, i32) {
    %c0_i32 = arith.constant 0 : i32
    %c0_i32_0 = arith.constant 0 : i32
    return %arg0, %c0_i32 : i32, i32
  }
  func.func @transform_1(%arg0: i32) -> (i32, i32) {
    %c0_i32 = arith.constant 0 : i32
    %c0_i32_0 = arith.constant 0 : i32
    %c0_i32_1 = arith.constant 0 : i32
    return %c0_i32, %c0_i32_0 : i32, i32
  }
  func.func @transform_2(%arg0: i32) -> (i32, i32) {
    %c0_i32 = arith.constant 0 : i32
    %c0_i32_0 = arith.constant 0 : i32
    %c0_i32_1 = arith.constant 0 : i32
    return %c0_i32, %c0_i32_0 : i32, i32
  }
  func.func @transform_3(%arg0: i32) -> (i32, i32) {
    %c0_i32 = arith.constant 0 : i32
    %c0_i32_0 = arith.constant 0 : i32
    %c0_i32_1 = arith.constant 0 : i32
    return %c0_i32, %c0_i32_0 : i32, i32
  }
  func.func @transform_4(%arg0: i32) -> (i32, i32) {
    %c0_i32 = arith.constant 0 : i32
    %c0_i32_0 = arith.constant 0 : i32
    %c0_i32_1 = arith.constant 0 : i32
    return %c0_i32, %c0_i32_0 : i32, i32
  }
  func.func @transform_5(%arg0: i32) -> (i32, i32) {
    %c0_i32 = arith.constant 0 : i32
    %c0_i32_0 = arith.constant 0 : i32
    %c0_i32_1 = arith.constant 0 : i32
    return %c0_i32, %c0_i32_0 : i32, i32
  }
  func.func @transform_6(%arg0: i32) -> (i32, i32) {
    %c0_i32 = arith.constant 0 : i32
    %c0_i32_0 = arith.constant 0 : i32
    %c0_i32_1 = arith.constant 0 : i32
    return %c0_i32, %c0_i32_0 : i32, i32
  }
  func.func @transform_7(%arg0: i32) -> (i32, i32) {
    %c0_i32 = arith.constant 0 : i32
    %c0_i32_0 = arith.constant 0 : i32
    return %c0_i32, %arg0 : i32, i32
  }
}

</mosaic_0001>

<llo_original>
// kernel: tpu_custom_call.1
$region0: #{tpu_custom_call.1}
  #allocation0 [shape = 'u32[]', space=smem, size = 0x4, offset = 0x4, fixed_abs, tag = 'smem constant byte address 0x4 - core index']
  #allocation1 [shape = 'u32[72,128]{1,0:T(1,128)}', space=vmem, size = 0x9000, scoped, tag = 'internal scratch']
  #allocation2 [shape = 'f32[1,1]{1,0:T(1,128)S(1)}', space=vmem, size = 0x200, scoped, tag = 'scoped memory for tpu_custom_call.1']
  %s0 = inlined_call_operand.vmem [shape: f32[128,8], index: 0, kind: input, shape index: {}]
  %s1 = inlined_call_operand.vmem [shape: bf16[8,128], index: 1, kind: input, shape index: {}]
  %s2 = inlined_call_operand.vmem [shape: f32[1,128], index: 2, kind: input, shape index: {}]
  %s3 = inlined_call_operand.vmem [shape: bf16[128,128], index: 3, kind: input, shape index: {}]
  %s4 = inlined_call_operand.vmem [shape: f32[1,128], index: 4, kind: input, shape index: {}]
  %s5 = inlined_call_operand.vmem [shape: bf16[1,128], index: 5, kind: input, shape index: {}]
  %s6 = inlined_call_operand.<no memory space> [shape: f32[1,1], index: 6, kind: input, shape index: {}]
  %s7 = inlined_call_operand.hbm [shape: f32[1,128], index: 7, kind: output, shape index: {}]
  %s8 = sld [smem:[#allocation0]]
  $region38: #{tpu_custom_call.1} parent=0
    _
  %s10 = ssub.s32 1, %s8
  %s11 = scalar_select 0, %s10, %s8
  %v12 = vstv %s6
  %13 = vst [vmem:[#allocation2] sm:$0x1] %v12
  $region1: #{tpu_custom_call.1} parent=0
    #allocation3 [shape = 'u8[512]{0}', space=vmem, size = 0x400, scoped, tag = 'output window, operand 0, single buffered']
    #allocation4 [shape = 's32[1]{0}', space=sflag, size = 0x4, scoped, tag = 'scoped memory for tpu_custom_call.1']
    %14 = vsyncpa [#allocation4], 0
    // Predicated region
    $region2: #{tpu_custom_call.1} parent=1 // pred_check
      _
    $region3: #{tpu_custom_call.1} parent=1 // pred_check_branch
      %16 = sbr.rel (0) target = $region5
    $region4: #{tpu_custom_call.1} parent=1 // pred_region
      _
    $region5: #{tpu_custom_call.1} parent=1 // pred_fallthru
      _
    // Predicated region
    $region6: #{tpu_custom_call.1} parent=1 // pred_check
      _
    $region7: #{tpu_custom_call.1} parent=1 // pred_check_branch
      %18 = sbr.rel (0) target = $region9
    $region8: #{tpu_custom_call.1} parent=1 // pred_region
      _
    $region9: #{tpu_custom_call.1} parent=1 // pred_fallthru
      _
    // Predicated region
    $region10: #{tpu_custom_call.1} parent=1 // pred_check
      _
    $region11: #{tpu_custom_call.1} parent=1 // pred_check_branch
      %20 = sbr.rel (0) target = $region13
    $region12: #{tpu_custom_call.1} parent=1 // pred_region
      _
    $region13: #{tpu_custom_call.1} parent=1 // pred_fallthru
      _
    // Predicated region
    $region14: #{tpu_custom_call.1} parent=1 // pred_check
      _
    $region15: #{tpu_custom_call.1} parent=1 // pred_check_branch
      %22 = sbr.rel (0) target = $region17
    $region16: #{tpu_custom_call.1} parent=1 // pred_region
      _
    $region17: #{tpu_custom_call.1} parent=1 // pred_fallthru
      _
    // Predicated region
    $region18: #{tpu_custom_call.1} parent=1 // pred_check
      _
    $region19: #{tpu_custom_call.1} parent=1 // pred_check_branch
      %24 = sbr.rel (0) target = $region21
    $region20: #{tpu_custom_call.1} parent=1 // pred_region
      _
    $region21: #{tpu_custom_call.1} parent=1 // pred_fallthru
      _
    // Predicated region
    $region22: #{tpu_custom_call.1} parent=1 // pred_check
      _
    $region23: #{tpu_custom_call.1} parent=1 // pred_check_branch
      %26 = sbr.rel (0) target = $region25
    $region24: #{tpu_custom_call.1} parent=1 // pred_region
      _
    $region25: #{tpu_custom_call.1} parent=1 // pred_fallthru
      _
    // Predicated region
    $region26: #{tpu_custom_call.1} parent=1 // pred_check
      _
    $region27: #{tpu_custom_call.1} parent=1 // pred_check_branch
      %28 = sbr.rel (0) target = $region29
    $region28: #{tpu_custom_call.1} parent=1 // pred_region
      _
    $region29: #{tpu_custom_call.1} parent=1 // pred_fallthru
      _
    %v30 = vld [vmem:[%s1] sm:$0xf]
    %v31 = vld [vmem:[%s2] sm:$0x1]
    %v32 = vld [vmem:[%s3] sm:$0xf]
    %v33 = vld [vmem:[%s3 + $0x4] sm:$0xf]
    %v34 = vld [vmem:[%s3 + $0x8] sm:$0xf]
    %v35 = vld [vmem:[%s3 + $0xc] sm:$0xf]
    %v36 = vld [vmem:[%s3 + $0x10] sm:$0xf]
    %v37 = vld [vmem:[%s3 + $0x14] sm:$0xf]
    %v38 = vld [vmem:[%s3 + $0x18] sm:$0xf]
    %v39 = vld [vmem:[%s3 + $0x1c] sm:$0xf]
    %v40 = vld [vmem:[%s3 + $0x20] sm:$0xf]
    %v41 = vld [vmem:[%s3 + $0x24] sm:$0xf]
    %v42 = vld [vmem:[%s3 + $0x28] sm:$0xf]
    %v43 = vld [vmem:[%s3 + $0x2c] sm:$0xf]
    %v44 = vld [vmem:[%s3 + $0x30] sm:$0xf]
    %v45 = vld [vmem:[%s3 + $0x34] sm:$0xf]
    %v46 = vld [vmem:[%s3 + $0x38] sm:$0xf]
    %v47 = vld [vmem:[%s3 + $0x3c] sm:$0xf]
    %v48 = vld [vmem:[%s4] sm:$0x1]
    %v49 = vld [vmem:[%s5] sm:$0x1]
    %v50 = vld [vmem:[#allocation2] sm:$0x1]
    %v51 = vld [vmem:[%s0] sm:$0xff]
    %v52 = vld [vmem:[%s0 + $0x8] sm:$0xff]
    %v53 = vld [vmem:[%s0 + $0x10] sm:$0xff]
    %v54 = vld [vmem:[%s0 + $0x18] sm:$0xff]
    %v55 = vld [vmem:[%s0 + $0x20] sm:$0xff]
    %v56 = vld [vmem:[%s0 + $0x28] sm:$0xff]
    %v57 = vld [vmem:[%s0 + $0x30] sm:$0xff]
    %v58 = vld [vmem:[%s0 + $0x38] sm:$0xff]
    %v59 = vpack.c.bf16 %v52, %v51
    %v60 = vpack.c.bf16 %v54, %v53
    %v61 = vpack.c.bf16 %v56, %v55
    %v62 = vpack.c.bf16 %v58, %v57
    %v64 = vperm.slane %v31, 0
    %vm66 = vcmask 64512
    %v68 = vsel %vm66, %v59, 0
    %v71 = vsel %vm66, %v60, 0
    %v74 = vsel %vm66, %v61, 0
    %v77 = vsel %vm66, %v62, 0
    %vm79 = vcmask 1043456
    %v81 = vsel %vm79, %v30, 0
    %83 = vmatpush.bf16.msra.mxu0 0
    %84 = vmatpush.bf16.msra.mxu0 0
    %85 = vmatpush.bf16.msra.mxu0 0
    %86 = vmatpush.bf16.msra.mxu0 0
    %87 = vmatpush.bf16.msra.mxu0 0
    %88 = vmatpush.bf16.msra.mxu0 0
    %89 = vmatpush.bf16.msra.mxu0 0
    %90 = vmatpush.bf16.msra.mxu0 %v81
    %91 = vmatmul.bf16.gmra.mxu0 %v68
    %v92 = vpop.f32.mrf.mxu0
    %v93 = vadd.f32 %v64, %v92
    %v94 = vpop.f32.mrf.mxu0
    %v95 = vadd.f32 %v64, %v94
    %96 = vmatmul.bf16.gmra.mxu0 %v71
    %v97 = vpop.f32.mrf.mxu0
    %v98 = vadd.f32 %v64, %v97
    %v99 = vpop.f32.mrf.mxu0
    %v100 = vadd.f32 %v64, %v99
    %101 = vmatmul.bf16.gmra.mxu0 %v74
    %v102 = vpop.f32.mrf.mxu0
    %v103 = vadd.f32 %v64, %v102
    %v104 = vpop.f32.mrf.mxu0
    %v105 = vadd.f32 %v64, %v104
    %106 = vmatmul.bf16.gmra.mxu0 %v77
    %v107 = vpop.f32.mrf.mxu0
    %v108 = vadd.f32 %v64, %v107
    %v109 = vpop.f32.mrf.mxu0
    %v110 = vadd.f32 %v64, %v109
    %111 = vdwg.mxu0
    %v112 = vpack.c.bf16 %v95, %v93
    %v113 = vpack.c.bf16 %v100, %v98
    %v114 = vpack.c.bf16 %v105, %v103
    %v115 = vpack.c.bf16 %v110, %v108
    %v117 = vperm.slane %v48, 0
    %v135 = vunpack.c.l.b16 %v32
    %v136 = vunpack.c.l.b16 %v33
    %v137 = vunpack.c.l.b16 %v34
    %v138 = vunpack.c.l.b16 %v35
    %v139 = vunpack.c.l.b16 %v36
    %v140 = vunpack.c.l.b16 %v37
    %v141 = vunpack.c.l.b16 %v38
    %v142 = vunpack.c.l.b16 %v39
    %v143 = vunpack.c.l.b16 %v40
    %v144 = vunpack.c.l.b16 %v41
    %v145 = vunpack.c.l.b16 %v42
    %v146 = vunpack.c.l.b16 %v43
    %v147 = vunpack.c.l.b16 %v44
    %v148 = vunpack.c.l.b16 %v45
    %v149 = vunpack.c.l.b16 %v46
    %v150 = vunpack.c.l.b16 %v47
    %v151 = vpack.c.b16 %v136, %v135
    %v152 = vpack.c.b16 %v138, %v137
    %v153 = vpack.c.b16 %v140, %v139
    %v154 = vpack.c.b16 %v142, %v141
    %v155 = vpack.c.b16 %v144, %v143
    %v156 = vpack.c.b16 %v146, %v145
    %v157 = vpack.c.b16 %v148, %v147
    %v158 = vpack.c.b16 %v150, %v149
    %167 = vmatpush.bf16.msra.mxu0 %v158
    %168 = vmatpush.bf16.msra.mxu0 %v157
    %169 = vmatpush.bf16.msra.mxu0 %v156
    %170 = vmatpush.bf16.msra.mxu0 %v155
    %171 = vmatpush.bf16.msra.mxu0 %v154
    %172 = vmatpush.bf16.msra.mxu0 %v153
    %173 = vmatpush.bf16.msra.mxu0 %v152
    %174 = vmatpush.bf16.msra.mxu0 %v151
    %175 = vmatmul.bf16.gmra.mxu0 %v112
    %v176 = vpop.f32.mrf.mxu0
    %v177 = vadd.f32 %v117, %v176
    %v178 = vpop.f32.mrf.mxu0
    %v179 = vadd.f32 %v117, %v178
    %180 = vmatmul.bf16.gmra.mxu0 %v113
    %v181 = vpop.f32.mrf.mxu0
    %v182 = vadd.f32 %v117, %v181
    %v183 = vpop.f32.mrf.mxu0
    %v184 = vadd.f32 %v117, %v183
    %185 = vmatmul.bf16.gmra.mxu0 %v114
    %v186 = vpop.f32.mrf.mxu0
    %v187 = vadd.f32 %v117, %v186
    %v188 = vpop.f32.mrf.mxu0
    %v189 = vadd.f32 %v117, %v188
    %190 = vmatmul.bf16.gmra.mxu0 %v115
    %v191 = vpop.f32.mrf.mxu0
    %v192 = vadd.f32 %v117, %v191
    %v193 = vpop.f32.mrf.mxu0
    %v194 = vadd.f32 %v117, %v193
    %195 = vdwg.mxu0
    %v196 = vtanh.pop %v177
    %v197 = vtanh.pop %v179
    %v198 = vtanh.pop %v182
    %v199 = vtanh.pop %v184
    %v200 = vtanh.pop %v187
    %v201 = vtanh.pop %v189
    %v202 = vtanh.pop %v192
    %v203 = vtanh.pop %v194
    %v204 = vpack.c.bf16 %v197, %v196
    %v205 = vpack.c.bf16 %v199, %v198
    %v206 = vpack.c.bf16 %v201, %v200
    %v207 = vpack.c.bf16 %v203, %v202
    %208 = vmatpush.bf16.msra.mxu0 %v158
    %209 = vmatpush.bf16.msra.mxu0 %v157
    %210 = vmatpush.bf16.msra.mxu0 %v156
    %211 = vmatpush.bf16.msra.mxu0 %v155
    %212 = vmatpush.bf16.msra.mxu0 %v154
    %213 = vmatpush.bf16.msra.mxu0 %v153
    %214 = vmatpush.bf16.msra.mxu0 %v152
    %215 = vmatpush.bf16.msra.mxu0 %v151
    %216 = vmatmul.bf16.gmra.mxu0 %v204
    %v217 = vpop.f32.mrf.mxu0
    %v218 = vadd.f32 %v117, %v217
    %v219 = vpop.f32.mrf.mxu0
    %v220 = vadd.f32 %v117, %v219
    %221 = vmatmul.bf16.gmra.mxu0 %v205
    %v222 = vpop.f32.mrf.mxu0
    %v223 = vadd.f32 %v117, %v222
    %v224 = vpop.f32.mrf.mxu0
    %v225 = vadd.f32 %v117, %v224
    %226 = vmatmul.bf16.gmra.mxu0 %v206
    %v227 = vpop.f32.mrf.mxu0
    %v228 = vadd.f32 %v117, %v227
    %v229 = vpop.f32.mrf.mxu0
    %v230 = vadd.f32 %v117, %v229
    %231 = vmatmul.bf16.gmra.mxu0 %v207
    %v232 = vpop.f32.mrf.mxu0
    %v233 = vadd.f32 %v117, %v232
    %v234 = vpop.f32.mrf.mxu0
    %v235 = vadd.f32 %v117, %v234
    %236 = vdwg.mxu0
    %v237 = vtanh.pop %v218
    %v238 = vtanh.pop %v220
    %v239 = vtanh.pop %v223
    %v240 = vtanh.pop %v225
    %v241 = vtanh.pop %v228
    %v242 = vtanh.pop %v230
    %v243 = vtanh.pop %v233
    %v244 = vtanh.pop %v235
    %v245 = vpack.c.bf16 %v238, %v237
    %v246 = vpack.c.bf16 %v240, %v239
    %v247 = vpack.c.bf16 %v242, %v241
    %v248 = vpack.c.bf16 %v244, %v243
    %249 = vmatpush.bf16.msra.mxu0 %v158
    %250 = vmatpush.bf16.msra.mxu0 %v157
    %251 = vmatpush.bf16.msra.mxu0 %v156
    %252 = vmatpush.bf16.msra.mxu0 %v155
    %253 = vmatpush.bf16.msra.mxu0 %v154
    %254 = vmatpush.bf16.msra.mxu0 %v153
    %255 = vmatpush.bf16.msra.mxu0 %v152
    %256 = vmatpush.bf16.msra.mxu0 %v151
    %257 = vmatmul.bf16.gmra.mxu0 %v245
    %v258 = vpop.f32.mrf.mxu0
    %v259 = vadd.f32 %v117, %v258
    %v260 = vpop.f32.mrf.mxu0
    %v261 = vadd.f32 %v117, %v260
    %262 = vmatmul.bf16.gmra.mxu0 %v246
    %v263 = vpop.f32.mrf.mxu0
    %v264 = vadd.f32 %v117, %v263
    %v265 = vpop.f32.mrf.mxu0
    %v266 = vadd.f32 %v117, %v265
    %267 = vmatmul.bf16.gmra.mxu0 %v247
    %v268 = vpop.f32.mrf.mxu0
    %v269 = vadd.f32 %v117, %v268
    %v270 = vpop.f32.mrf.mxu0
    %v271 = vadd.f32 %v117, %v270
    %272 = vmatmul.bf16.gmra.mxu0 %v248
    %v273 = vpop.f32.mrf.mxu0
    %v274 = vadd.f32 %v117, %v273
    %v275 = vpop.f32.mrf.mxu0
    %v276 = vadd.f32 %v117, %v275
    %277 = vdwg.mxu0
    %v278 = vtanh.pop %v259
    %v279 = vtanh.pop %v261
    %v280 = vtanh.pop %v264
    %v281 = vtanh.pop %v266
    %v282 = vtanh.pop %v269
    %v283 = vtanh.pop %v271
    %v284 = vtanh.pop %v274
    %v285 = vtanh.pop %v276
    %286 = vxpose.xlu0.b32.start [1/16] %v278, 128
    %287 = vxpose.xlu0.b32.cont [2/16] %v279, 128
    %288 = vxpose.xlu0.b32.cont [3/16] %v280, 128
    %289 = vxpose.xlu0.b32.cont [4/16] %v281, 128
    %290 = vxpose.xlu0.b32.cont [5/16] %v282, 128
    %291 = vxpose.xlu0.b32.cont [6/16] %v283, 128
    %292 = vxpose.xlu0.b32.cont [7/16] %v284, 128
    %293 = vxpose.xlu0.b32.cont [8/16] %v285, 128
    %294 = vxpose.xlu0.b32.cont [9/16] 0.0, 128
    %295 = vxpose.xlu0.b32.cont [10/16] 0.0, 128
    %296 = vxpose.xlu0.b32.cont [11/16] 0.0, 128
    %297 = vxpose.xlu0.b32.cont [12/16] 0.0, 128
    %298 = vxpose.xlu0.b32.cont [13/16] 0.0, 128
    %299 = vxpose.xlu0.b32.cont [14/16] 0.0, 128
    %300 = vxpose.xlu0.b32.cont [15/16] 0.0, 128
    %301 = vxpose.xlu0.b32.end [16/16] 0.0, 128
    %v302 = vpop.trf.xlu0
    %v303 = vpop.trf.xlu0
    %v304 = vpop.trf.xlu0
    %v305 = vpop.trf.xlu0
    %v306 = vpop.trf.xlu0
    %v307 = vpop.trf.xlu0
    %v308 = vpop.trf.xlu0
    %v309 = vpop.trf.xlu0
    %v310 = vpop.trf.xlu0
    %v311 = vpop.trf.xlu0
    %v312 = vpop.trf.xlu0
    %v313 = vpop.trf.xlu0
    %v314 = vpop.trf.xlu0
    %v315 = vpop.trf.xlu0
    %v316 = vpop.trf.xlu0
    %v317 = vpop.trf.xlu0
    %v318 = vpack.c.bf16 %v303, %v302
    %v319 = vpack.c.bf16 %v305, %v304
    %v320 = vpack.c.bf16 %v307, %v306
    %v321 = vpack.c.bf16 %v309, %v308
    %v322 = vpack.c.bf16 %v311, %v310
    %v323 = vpack.c.bf16 %v313, %v312
    %v324 = vpack.c.bf16 %v315, %v314
    %v325 = vpack.c.bf16 %v317, %v316
    %327 = vset.pattern.permute.xlu0 0
    %328 = vperm.xlu0 %327, %v50
    %v329 = vpop.permute.xlu0 %328
    %v331 = vperm.slane %v329, 0
    %332 = vmatpush.bf16.msra.mxu0 %v325
    %333 = vmatpush.bf16.msra.mxu0 %v324
    %334 = vmatpush.bf16.msra.mxu0 %v323
    %335 = vmatpush.bf16.msra.mxu0 %v322
    %336 = vmatpush.bf16.msra.mxu0 %v321
    %337 = vmatpush.bf16.msra.mxu0 %v320
    %338 = vmatpush.bf16.msra.mxu0 %v319
    %339 = vmatpush.bf16.msra.mxu0 %v318
    %340 = vmatmul.bf16.gmra.mxu0 %v49
    %v341 = vpop.f32.mrf.mxu0
    %v342 = vadd.f32 %v331, %v341
    %v343 = vpop.f32.mrf.mxu0
    %344 = vdwg.mxu0
    %v345 = vld [vmem:[%s0 + $0x40] sm:$0xff]
    %v346 = vld [vmem:[%s0 + $0x48] sm:$0xff]
    %v347 = vld [vmem:[%s0 + $0x50] sm:$0xff]
    %v348 = vld [vmem:[%s0 + $0x58] sm:$0xff]
    %v349 = vld [vmem:[%s0 + $0x60] sm:$0xff]
    %v350 = vld [vmem:[%s0 + $0x68] sm:$0xff]
    %v351 = vld [vmem:[%s0 + $0x70] sm:$0xff]
    %v352 = vld [vmem:[%s0 + $0x78] sm:$0xff]
    %v353 = vpack.c.bf16 %v346, %v345
    %v354 = vpack.c.bf16 %v348, %v347
    %v355 = vpack.c.bf16 %v350, %v349
    %v356 = vpack.c.bf16 %v352, %v351
    %v358 = vsel %vm66, %v353, 0
    %v361 = vsel %vm66, %v354, 0
    %v364 = vsel %vm66, %v355, 0
    %v367 = vsel %vm66, %v356, 0
    %369 = vmatpush.bf16.msra.mxu0 0
    %370 = vmatpush.bf16.msra.mxu0 0
    %371 = vmatpush.bf16.msra.mxu0 0
    %372 = vmatpush.bf16.msra.mxu0 0
    %373 = vmatpush.bf16.msra.mxu0 0
    %374 = vmatpush.bf16.msra.mxu0 0
    %375 = vmatpush.bf16.msra.mxu0 0
    %376 = vmatpush.bf16.msra.mxu0 %v81
    %377 = vmatmul.bf16.gmra.mxu0 %v358
    %v378 = vpop.f32.mrf.mxu0
    %v379 = vadd.f32 %v64, %v378
    %v380 = vpop.f32.mrf.mxu0
    %v381 = vadd.f32 %v64, %v380
    %382 = vmatmul.bf16.gmra.mxu0 %v361
    %v383 = vpop.f32.mrf.mxu0
    %v384 = vadd.f32 %v64, %v383
    %v385 = vpop.f32.mrf.mxu0
    %v386 = vadd.f32 %v64, %v385
    %387 = vmatmul.bf16.gmra.mxu0 %v364
    %v388 = vpop.f32.mrf.mxu0
    %v389 = vadd.f32 %v64, %v388
    %v390 = vpop.f32.mrf.mxu0
    %v391 = vadd.f32 %v64, %v390
    %392 = vmatmul.bf16.gmra.mxu0 %v367
    %v393 = vpop.f32.mrf.mxu0
    %v394 = vadd.f32 %v64, %v393
    %v395 = vpop.f32.mrf.mxu0
    %v396 = vadd.f32 %v64, %v395
    %397 = vdwg.mxu0
    %v398 = vpack.c.bf16 %v381, %v379
    %v399 = vpack.c.bf16 %v386, %v384
    %v400 = vpack.c.bf16 %v391, %v389
    %v401 = vpack.c.bf16 %v396, %v394
    %402 = vmatpush.bf16.msra.mxu0 %v158
    %403 = vmatpush.bf16.msra.mxu0 %v157
    %404 = vmatpush.bf16.msra.mxu0 %v156
    %405 = vmatpush.bf16.msra.mxu0 %v155
    %406 = vmatpush.bf16.msra.mxu0 %v154
    %407 = vmatpush.bf16.msra.mxu0 %v153
    %408 = vmatpush.bf16.msra.mxu0 %v152
    %409 = vmatpush.bf16.msra.mxu0 %v151
    %410 = vmatmul.bf16.gmra.mxu0 %v398
    %v411 = vpop.f32.mrf.mxu0
    %v412 = vadd.f32 %v117, %v411
    %v413 = vpop.f32.mrf.mxu0
    %v414 = vadd.f32 %v117, %v413
    %415 = vmatmul.bf16.gmra.mxu0 %v399
    %v416 = vpop.f32.mrf.mxu0
    %v417 = vadd.f32 %v117, %v416
    %v418 = vpop.f32.mrf.mxu0
    %v419 = vadd.f32 %v117, %v418
    %420 = vmatmul.bf16.gmra.mxu0 %v400
    %v421 = vpop.f32.mrf.mxu0
    %v422 = vadd.f32 %v117, %v421
    %v423 = vpop.f32.mrf.mxu0
    %v424 = vadd.f32 %v117, %v423
    %425 = vmatmul.bf16.gmra.mxu0 %v401
    %v426 = vpop.f32.mrf.mxu0
    %v427 = vadd.f32 %v117, %v426
    %v428 = vpop.f32.mrf.mxu0
    %v429 = vadd.f32 %v117, %v428
    %430 = vdwg.mxu0
    %v431 = vtanh.pop %v412
    %v432 = vtanh.pop %v414
    %v433 = vtanh.pop %v417
    %v434 = vtanh.pop %v419
    %v435 = vtanh.pop %v422
    %v436 = vtanh.pop %v424
    %v437 = vtanh.pop %v427
    %v438 = vtanh.pop %v429
    %v439 = vpack.c.bf16 %v432, %v431
    %v440 = vpack.c.bf16 %v434, %v433
    %v441 = vpack.c.bf16 %v436, %v435
    %v442 = vpack.c.bf16 %v438, %v437
    %443 = vmatpush.bf16.msra.mxu0 %v158
    %444 = vmatpush.bf16.msra.mxu0 %v157
    %445 = vmatpush.bf16.msra.mxu0 %v156
    %446 = vmatpush.bf16.msra.mxu0 %v155
    %447 = vmatpush.bf16.msra.mxu0 %v154
    %448 = vmatpush.bf16.msra.mxu0 %v153
    %449 = vmatpush.bf16.msra.mxu0 %v152
    %450 = vmatpush.bf16.msra.mxu0 %v151
    %451 = vmatmul.bf16.gmra.mxu0 %v439
    %v452 = vpop.f32.mrf.mxu0
    %v453 = vadd.f32 %v117, %v452
    %v454 = vpop.f32.mrf.mxu0
    %v455 = vadd.f32 %v117, %v454
    %456 = vmatmul.bf16.gmra.mxu0 %v440
    %v457 = vpop.f32.mrf.mxu0
    %v458 = vadd.f32 %v117, %v457
    %v459 = vpop.f32.mrf.mxu0
    %v460 = vadd.f32 %v117, %v459
    %461 = vmatmul.bf16.gmra.mxu0 %v441
    %v462 = vpop.f32.mrf.mxu0
    %v463 = vadd.f32 %v117, %v462
    %v464 = vpop.f32.mrf.mxu0
    %v465 = vadd.f32 %v117, %v464
    %466 = vmatmul.bf16.gmra.mxu0 %v442
    %v467 = vpop.f32.mrf.mxu0
    %v468 = vadd.f32 %v117, %v467
    %v469 = vpop.f32.mrf.mxu0
    %v470 = vadd.f32 %v117, %v469
    %471 = vdwg.mxu0
    %v472 = vtanh.pop %v453
    %v473 = vtanh.pop %v455
    %v474 = vtanh.pop %v458
    %v475 = vtanh.pop %v460
    %v476 = vtanh.pop %v463
    %v477 = vtanh.pop %v465
    %v478 = vtanh.pop %v468
    %v479 = vtanh.pop %v470
    %v480 = vpack.c.bf16 %v473, %v472
    %v481 = vpack.c.bf16 %v475, %v474
    %v482 = vpack.c.bf16 %v477, %v476
    %v483 = vpack.c.bf16 %v479, %v478
    %484 = vmatpush.bf16.msra.mxu0 %v158
    %485 = vmatpush.bf16.msra.mxu0 %v157
    %486 = vmatpush.bf16.msra.mxu0 %v156
    %487 = vmatpush.bf16.msra.mxu0 %v155
    %488 = vmatpush.bf16.msra.mxu0 %v154
    %489 = vmatpush.bf16.msra.mxu0 %v153
    %490 = vmatpush.bf16.msra.mxu0 %v152
    %491 = vmatpush.bf16.msra.mxu0 %v151
    %492 = vmatmul.bf16.gmra.mxu0 %v480
    %v493 = vpop.f32.mrf.mxu0
    %v494 = vadd.f32 %v117, %v493
    %v495 = vpop.f32.mrf.mxu0
    %v496 = vadd.f32 %v117, %v495
    %497 = vmatmul.bf16.gmra.mxu0 %v481
    %v498 = vpop.f32.mrf.mxu0
    %v499 = vadd.f32 %v117, %v498
    %v500 = vpop.f32.mrf.mxu0
    %v501 = vadd.f32 %v117, %v500
    %502 = vmatmul.bf16.gmra.mxu0 %v482
    %v503 = vpop.f32.mrf.mxu0
    %v504 = vadd.f32 %v117, %v503
    %v505 = vpop.f32.mrf.mxu0
    %v506 = vadd.f32 %v117, %v505
    %507 = vmatmul.bf16.gmra.mxu0 %v483
    %v508 = vpop.f32.mrf.mxu0
    %v509 = vadd.f32 %v117, %v508
    %v510 = vpop.f32.mrf.mxu0
    %v511 = vadd.f32 %v117, %v510
    %512 = vdwg.mxu0
    %v513 = vtanh.pop %v494
    %v514 = vtanh.pop %v496
    %v515 = vtanh.pop %v499
    %v516 = vtanh.pop %v501
    %v517 = vtanh.pop %v504
    %v518 = vtanh.pop %v506
    %v519 = vtanh.pop %v509
    %v520 = vtanh.pop %v511
    %521 = vxpose.xlu0.b32.start [1/16] %v513, 128
    %522 = vxpose.xlu0.b32.cont [2/16] %v514, 128
    %523 = vxpose.xlu0.b32.cont [3/16] %v515, 128
    %524 = vxpose.xlu0.b32.cont [4/16] %v516, 128
    %525 = vxpose.xlu0.b32.cont [5/16] %v517, 128
    %526 = vxpose.xlu0.b32.cont [6/16] %v518, 128
    %527 = vxpose.xlu0.b32.cont [7/16] %v519, 128
    %528 = vxpose.xlu0.b32.cont [8/16] %v520, 128
    %529 = vxpose.xlu0.b32.cont [9/16] 0.0, 128
    %530 = vxpose.xlu0.b32.cont [10/16] 0.0, 128
    %531 = vxpose.xlu0.b32.cont [11/16] 0.0, 128
    %532 = vxpose.xlu0.b32.cont [12/16] 0.0, 128
    %533 = vxpose.xlu0.b32.cont [13/16] 0.0, 128
    %534 = vxpose.xlu0.b32.cont [14/16] 0.0, 128
    %535 = vxpose.xlu0.b32.cont [15/16] 0.0, 128
    %536 = vxpose.xlu0.b32.end [16/16] 0.0, 128
    %v537 = vpop.trf.xlu0
    %v538 = vpop.trf.xlu0
    %v539 = vpop.trf.xlu0
    %v540 = vpop.trf.xlu0
    %v541 = vpop.trf.xlu0
    %v542 = vpop.trf.xlu0
    %v543 = vpop.trf.xlu0
    %v544 = vpop.trf.xlu0
    %v545 = vpop.trf.xlu0
    %v546 = vpop.trf.xlu0
    %v547 = vpop.trf.xlu0
    %v548 = vpop.trf.xlu0
    %v549 = vpop.trf.xlu0
    %v550 = vpop.trf.xlu0
    %v551 = vpop.trf.xlu0
    %v552 = vpop.trf.xlu0
    %v553 = vpack.c.bf16 %v538, %v537
    %v554 = vpack.c.bf16 %v540, %v539
    %v555 = vpack.c.bf16 %v542, %v541
    %v556 = vpack.c.bf16 %v544, %v543
    %v557 = vpack.c.bf16 %v546, %v545
    %v558 = vpack.c.bf16 %v548, %v547
    %v559 = vpack.c.bf16 %v550, %v549
    %v560 = vpack.c.bf16 %v552, %v551
    %561 = vmatpush.bf16.msra.mxu0 %v560
    %562 = vmatpush.bf16.msra.mxu0 %v559
    %563 = vmatpush.bf16.msra.mxu0 %v558
    %564 = vmatpush.bf16.msra.mxu0 %v557
    %565 = vmatpush.bf16.msra.mxu0 %v556
    %566 = vmatpush.bf16.msra.mxu0 %v555
    %567 = vmatpush.bf16.msra.mxu0 %v554
    %568 = vmatpush.bf16.msra.mxu0 %v553
    %569 = vmatmul.bf16.gmra.mxu0 %v49
    %v570 = vpop.f32.mrf.mxu0
    %v571 = vadd.f32 %v331, %v570
    %v572 = vpop.f32.mrf.mxu0
    %573 = vdwg.mxu0
    %vm574 = vcmask 516096
    %575 = vst.msk [vmem:[#allocation3] sm:$0x1] %vm574, %v342
    %577 = vrot.lane.b32.xlu0 %v571, 64
    %v578 = vpop.permute.xlu0 %577
    %vm580 = vcmask 1040896
    %581 = vst.msk [vmem:[#allocation3] sm:$0x1] %vm580, %v578
    // Predicated region
    $region30: #{tpu_custom_call.1} parent=1 // pred_check
      _
    $region31: #{tpu_custom_call.1} parent=1 // pred_check_branch
      %583 = sbr.rel (0) target = $region33
    $region32: #{tpu_custom_call.1} parent=1 // pred_region
      %585 = vsyncadd [#allocation4], 0
      %s587 = sshll.u32 [#allocation3], 4
      %s588 = int_to_ptr.vmem [resolvable:$true] %s587
      %s589 = sshll.u32 %s7, 4
      %s590 = int_to_ptr.hbm [resolvable:$true] %s589
      %592 = dma.vmem_to_hbm [thread:$0]  %s588, 16, %s590, [#allocation4]
    $region33: #{tpu_custom_call.1} parent=1 // pred_fallthru
      _
    // Predicated region
    $region34: #{tpu_custom_call.1} parent=1 // pred_check
      _
    $region35: #{tpu_custom_call.1} parent=1 // pred_check_branch
      %594 = sbr.rel (0) target = $region37
    $region36: #{tpu_custom_call.1} parent=1 // pred_region
      %596 = dma.done [#allocation4], 16
    $region37: #{tpu_custom_call.1} parent=1 // pred_fallthru
      _
    %597 = vsyncpa [#allocation4], 1

</llo_original>
